<compile_context>
chip_gen: v7x
topology: tpu7x:2x2x1
jax: 0.10.0
libtpu: 0.0.40
codegen_flags: <defaults>
</compile_context>

<pallas_src>
import jax
import jax.numpy as jnp
from jax.experimental import pallas as pl
from jax.experimental.pallas import tpu as pltpu

_LANES = 128       # vreg lane width (output slab minor dim -> unmasked vst)
_SUBLANES = 8      # f32 sublane tile
_CHUNK_ROWS = 256  # per-store chunk: 256x128 f32 = 128 KiB (<= 32 vregs)


def _round_up(x, m):
    return ((x + m - 1) // m) * m


def _variance_kernel(inv_s_ref, out_ref):
    # inv_s_ref: (1,) f32 in SMEM (scalar-prefetch) holding exp(variance * 10).
    # out_ref:   (rpb, 128) f32 lane-dense output block in VMEM.
    rpb = out_ref.shape[0]
    val = inv_s_ref[0]
    chunk = min(_CHUNK_ROWS, rpb)
    splat = jnp.full((chunk, _LANES), val, dtype=jnp.float32)
    n_full, rem = divmod(rpb, chunk)
    # Static unroll: repeated full-width stores of one replicated splat value.
    for c in range(n_full):
        out_ref[pl.ds(c * chunk, chunk), :] = splat
    if rem:
        out_ref[pl.ds(n_full * chunk, rem), :] = splat[:rem, :]


def variance_network_forward(x, variance, *, block_rows=4096):
    """Returns ones([len(x), 1]) * exp(variance * 10.0) computed in Pallas.

    The kernel writes a lane-dense (rows, 128) float32 slab (rows = cdiv(n, 128));
    since every element holds the identical scalar, flattening row-major to
    (rows*128, 1) and (only if n is unaligned) taking the first n rows
    reproduces the PyTorch output exactly.
    """
    n = int(x.shape[0])

    # Number of 128-lane rows needed to cover n outputs (no extra padding).
    rows = max(1, pl.cdiv(n, _LANES))

    # Sanitize caller-provided block_rows to a multiple of 8 sublanes.
    block_rows = max(_SUBLANES, _round_up(int(block_rows), _SUBLANES))

    # Rows per block: multiple of 8, no larger than needed.
    rpb = min(block_rows, _round_up(rows, _SUBLANES))
    # Megacore split (v7x has 2 TCs): for large row counts guarantee >= 2 blocks
    # so the "parallel" grid axis can be sharded across both TensorCores.
    if rows >= 64:
        rpb = min(rpb, _round_up(pl.cdiv(rows, 2), _SUBLANES))
    num_blocks = pl.cdiv(rows, rpb)

    # Scalar math hoisted out of the kernel: one XLA scalar exp, prefetched
    # into SMEM. The kernel is then a pure store-bound broadcast.
    inv_s = jnp.exp(jnp.asarray(variance, dtype=jnp.float32) * 10.0).reshape((1,))

    slab = pl.pallas_call(
        _variance_kernel,
        out_shape=jax.ShapeDtypeStruct((rows, _LANES), jnp.float32),
        grid_spec=pltpu.PrefetchScalarGridSpec(
            num_scalar_prefetch=1,
            grid=(num_blocks,),
            in_specs=[],
            out_specs=pl.BlockSpec((rpb, _LANES), lambda i, inv_s_ref: (i, 0)),
        ),
        compiler_params=pltpu.CompilerParams(
            dimension_semantics=("parallel",),
        ),
        cost_estimate=pl.CostEstimate(
            flops=0, transcendentals=0, bytes_accessed=rows * _LANES * 4
        ),
    )(inv_s)

    flat = slab.reshape(rows * _LANES, 1)
    if n == rows * _LANES:
        # Fast path (typical ray*sample batches): no post-kernel slice copy.
        return flat
    return flat[:n]


if __name__ == "__main__":
    key = jax.random.PRNGKey(0)

    # Deterministic "config": init_val = 0.3 (typical NeuS setting).
    init_val = 0.3
    variance = jnp.asarray(init_val, dtype=jnp.float32)  # nn.Parameter scalar

    inv_s_ref_val = jnp.exp(variance * 10.0)

    # Case 1: tiny, non-multiple-of-128 batch -> single block + slice path.
    x1 = jax.random.normal(key, (37, 3), dtype=jnp.float32)
    out1 = jax.block_until_ready(variance_network_forward(x1, variance))
    ref1 = jnp.ones((x1.shape[0], 1), jnp.float32) * inv_s_ref_val
    assert out1.shape == (x1.shape[0], 1), out1.shape
    assert jnp.allclose(out1, ref1, rtol=1e-6, atol=1e-6)

    # Case 2: 128-aligned batch -> fast path (no slice), multi-block grid with
    # megacore split and a masked partial last block (rows=100, rpb=56).
    x2 = jax.random.normal(key, (12800, 3), dtype=jnp.float32)
    out2 = jax.block_until_ready(variance_network_forward(x2, variance))
    ref2 = jnp.ones((x2.shape[0], 1), jnp.float32) * inv_s_ref_val
    assert out2.shape == (x2.shape[0], 1), out2.shape
    assert jnp.allclose(out2, ref2, rtol=1e-6, atol=1e-6)

    print("KERNEL_OK")
</pallas_src>

<mosaic_0001>
module attributes {stable_mosaic.version = 11 : i64} {
  func.func @_variance_kernel(%arg0: i32, %arg1: memref<1xf32, #tpu.memory_space<smem>>, %arg2: memref<8x128xf32, #tpu.memory_space<vmem>>) attributes {dimension_semantics = [#tpu.dimension_semantics<parallel>], iteration_bounds = array<i64: 1>, scalar_prefetch = 1 : i64, scratch_operands = 0 : i64, tpu.core_type = #tpu.core_type<tc>, window_params = [{transform_indices = @transform_0, window_bounds = array<i64: 8, 128>}]} {
    %c0 = arith.constant 0 : index
    %0 = memref.load %arg1[%c0] : memref<1xf32, #tpu.memory_space<smem>>
    %1 = vector.broadcast %0 : f32 to vector<8x128xf32>
    %c0_0 = arith.constant 0 : index
    %c0_1 = arith.constant 0 : index
    %2 = vector.load %arg2[%c0_0, %c0_1] : memref<8x128xf32, #tpu.memory_space<vmem>>, vector<8x128xf32>
    tpu.vector_store %arg2[%c0_0, %c0_1], %1 {strides = array<i32>} : memref<8x128xf32, #tpu.memory_space<vmem>>, vector<8x128xf32>,
    return
  }
  func.func @transform_0(%arg0: i32, %arg1: memref<1xf32, #tpu.memory_space<smem>>) -> (i32, i32) {
    %c0_i32 = arith.constant 0 : i32
    %c0_i32_0 = arith.constant 0 : i32
    return %arg0, %c0_i32 : i32, i32
  }
}

</mosaic_0001>

<llo_original>
// kernel: tpu_custom_call.1
$region0: #{tpu_custom_call.1}
  #allocation0 [shape = 'u32[]', space=smem, size = 0x4, offset = 0x4, fixed_abs, tag = 'smem constant byte address 0x4 - core index']
  #allocation1 [shape = 'u32[144,128]{1,0:T(1,128)}', space=vmem, size = 0x12000, scoped, tag = 'internal scratch']
  #allocation2 [shape = 's32[1]{0}', space=sflag, size = 0x4, scoped, tag = 'scoped memory for tpu_custom_call.1']
  #allocation3 [shape = 'f32[1]{0:T(128)S(6)}', space=smem, size = 0x200, scoped, tag = 'prefetched SMEM operand 0']
  %s0 = inlined_call_operand.<no memory space> [shape: f32[1], index: 0, kind: input, shape index: {}]
  %s1 = inlined_call_operand.hbm [shape: f32[1,128], index: 1, kind: output, shape index: {}]
  %s2 = sld [smem:[#allocation0]]
  $region10: #{tpu_custom_call.1} parent=0
    _
  %s4 = ssub.s32 1, %s2
  %s5 = scalar_select 0, %s4, %s2
  %6 = sst [smem:[#allocation3]] %s0
  $region1: #{tpu_custom_call.1} parent=0
    #allocation4 [shape = 'u8[4096]{0}', space=vmem, size = 0x1000, scoped, tag = 'output window, operand 0, single buffered']
    #allocation5 [shape = 's32[1]{0}', space=sflag, size = 0x4, scoped, tag = 'scoped memory for tpu_custom_call.1']
    %7 = vsyncpa [#allocation5], 0
    %s8 = sld [smem:[#allocation3]]
    %v9 = vstv %s8
    %10 = vst [vmem:[#allocation4] sm:$0xff] %v9
    // Predicated region
    $region2: #{tpu_custom_call.1} parent=1 // pred_check
      _
    $region3: #{tpu_custom_call.1} parent=1 // pred_check_branch
      %12 = sbr.rel (0) target = $region5
    $region4: #{tpu_custom_call.1} parent=1 // pred_region
      %s14 = ssub.s32 128, 16
      %15 = vsyncadd [#allocation5], %s14
      %s16 = sshll.u32 [#allocation4], 4
      %s17 = int_to_ptr.vmem [resolvable:$true] %s16
      %22 = dma.vmem_to_hbm [thread:$0]  %s17, 16, %s1, [#allocation5], 16, 16, 1
    $region5: #{tpu_custom_call.1} parent=1 // pred_fallthru
      _
    // Predicated region
    $region6: #{tpu_custom_call.1} parent=1 // pred_check
      _
    $region7: #{tpu_custom_call.1} parent=1 // pred_check_branch
      %24 = sbr.rel (0) target = $region9
    $region8: #{tpu_custom_call.1} parent=1 // pred_region
      %25 = dma.done [#allocation5], 128
    $region9: #{tpu_custom_call.1} parent=1 // pred_fallthru
      _
    %26 = vsyncpa [#allocation5], 1

</llo_original>
